<compile_context>
chip_gen: v6e
topology: v6e:2x2x1
jax: 0.10.0
libtpu: 0.0.40
codegen_flags: <defaults>
</compile_context>

<pallas_src>
import math

import jax
import jax.numpy as jnp
from jax.experimental import pallas as pl
from jax.experimental.pallas import tpu as pltpu


def _build_pe_table(d_model: int, max_len: int) -> jnp.ndarray:
    """Positional-encoding buffer, matching the PyTorch __init__ exactly."""
    assert d_model % 2 == 0, "d_model must be even (same limitation as the PyTorch module)"
    position = jnp.arange(max_len, dtype=jnp.float32)[:, None]              # (max_len, 1)
    div_term = jnp.exp(
        jnp.arange(0, d_model, 2, dtype=jnp.float32)
        * (-math.log(10000.0) / d_model)
    )                                                                        # (d_model/2,)
    angles = position * div_term                                             # (max_len, d_model/2)
    pe = jnp.zeros((max_len, d_model), dtype=jnp.float32)
    pe = pe.at[:, 0::2].set(jnp.sin(angles))
    pe = pe.at[:, 1::2].set(jnp.cos(angles))
    return pe


def _add_pe_kernel(x_ref, pe_ref, o_ref):
    # x_ref/o_ref: (Bt, TS, D); pe_ref: (TS, D) -> numpy-broadcast over Bt.
    o_ref[...] = x_ref[...] + pe_ref[...]


def _vmem_plan():
    """(per-block byte target for the x/o blocks, vmem_limit_bytes)."""
    cap = None
    try:
        cap = getattr(pltpu.get_tpu_info(), "vmem_capacity_bytes", None)
    except Exception:
        cap = None
    mib = 1024 * 1024
    if cap is not None and cap >= 96 * mib:
        # v5e / v6e class: 128 MiB physical VMEM.
        # Live set ~ 4 x-sized + 2 pe-sized buffers -> <= ~48 MiB, under the limit.
        return 8 * mib, 64 * mib
    if cap is not None:
        # v7x class: 64 MiB VMEM per TensorCore -> keep headroom for scratch.
        return 4 * mib, 40 * mib
    # Unknown generation: conservative defaults (safe everywhere).
    return 4 * mib, 32 * mib


def _choose_tiles(b: int, s: int, d: int, itemsize: int, target_bytes: int):
    """Pick (Bt, TS): TS a sublane multiple (or the full seq dim), and Bt
    folded batch rows so Bt*TS*D*itemsize approaches target_bytes."""
    sublane = max(8, 32 // itemsize)          # 8 for f32, 16 for bf16
    row_bytes = max(1, d * itemsize)
    target_rows = max(1, target_bytes // row_bytes)
    if s <= max(target_rows, sublane):
        ts = s                                 # full seq dim: always a legal block dim
    else:
        ts = max(sublane, (target_rows // sublane) * sublane)   # multiple of sublane
    slab_bytes = ts * row_bytes
    bt = max(1, min(b, target_bytes // max(1, slab_bytes)))
    return bt, ts


def positional_encoding_forward(x: jnp.ndarray, pe: jnp.ndarray) -> jnp.ndarray:
    """x: (B, S, D); pe: (max_len, D).  Returns x + pe[:S] (broadcast over B)."""
    b, s, d = x.shape
    max_len = pe.shape[0]
    assert s <= max_len, f"seq_len {s} exceeds max_len {max_len}"
    assert pe.shape[1] == d, "pe d_model mismatch"

    # Glue outside the kernel: static slice + dtype match.
    # (Note: for low-precision x this rounds the table to x.dtype before the
    # add; keep pe in f32 here if bit-parity with the fp32-buffer add matters.)
    pe_slice = pe[:s, :].astype(x.dtype)

    itemsize = jnp.dtype(x.dtype).itemsize
    target_bytes, vmem_limit = _vmem_plan()
    bt, ts = _choose_tiles(b, s, d, itemsize, target_bytes)

    n_seq_tiles = pl.cdiv(s, ts)      # ragged last tile allowed
    n_bat_tiles = pl.cdiv(b, bt)      # ragged last batch group allowed
    grid = (n_seq_tiles, n_bat_tiles)  # batch innermost -> pe tile resident across it

    cost = pl.CostEstimate(
        flops=b * s * d,
        transcendentals=0,
        bytes_accessed=2 * b * s * d * itemsize + s * d * jnp.dtype(pe_slice.dtype).itemsize,
    )

    return pl.pallas_call(
        _add_pe_kernel,
        out_shape=jax.ShapeDtypeStruct((b, s, d), x.dtype),
        grid_spec=pltpu.PrefetchScalarGridSpec(
            num_scalar_prefetch=0,
            grid=grid,
            in_specs=[
                # x: a (Bt, TS, D) slab; D never tiled -> lane-dense loads/stores.
                pl.BlockSpec((bt, ts, d), lambda j, i: (i, j, 0)),
                # pe: block index constant over the inner (batch) axis -> resident.
                pl.BlockSpec((ts, d), lambda j, i: (j, 0)),
            ],
            out_specs=pl.BlockSpec((bt, ts, d), lambda j, i: (i, j, 0)),
        ),
        compiler_params=pltpu.CompilerParams(
            # Disjoint output blocks on both axes -> both shardable (v7x megacore).
            dimension_semantics=("parallel", "parallel"),
            vmem_limit_bytes=vmem_limit,
        ),
        cost_estimate=cost,
    )(x, pe_slice)


if __name__ == "__main__":
    # Small shapes consistent with the module's forward: (batch, seq, d_model).
    batch, seq_len, d_model_test, max_len = 2, 8, 512, 16

    key = jax.random.PRNGKey(0)
    x = jax.random.normal(key, (batch, seq_len, d_model_test), dtype=jnp.float32)

    pe = _build_pe_table(d_model_test, max_len)

    out = positional_encoding_forward(x, pe)
    out = jax.block_until_ready(out)

    # Sanity check against plain-JAX reference.
    ref = x + pe[:seq_len, :][None, :, :]
    assert out.shape == (batch, seq_len, d_model_test)
    assert jnp.allclose(out, ref, atol=1e-6), "mismatch vs reference"

    print("KERNEL_OK")
</pallas_src>

<mosaic_0001>
module attributes {stable_mosaic.version = 11 : i64} {
  func.func @_add_pe_kernel(%arg0: i32, %arg1: i32, %arg2: memref<2x8x512xf32, #tpu.memory_space<vmem>>, %arg3: memref<8x512xf32, #tpu.memory_space<vmem>>, %arg4: memref<2x8x512xf32, #tpu.memory_space<vmem>>) attributes {dimension_semantics = [#tpu.dimension_semantics<parallel>, #tpu.dimension_semantics<parallel>], iteration_bounds = array<i64: 1, 1>, scalar_prefetch = 0 : i64, scratch_operands = 0 : i64, tpu.core_type = #tpu.core_type<tc>, window_params = [{transform_indices = @transform_0, window_bounds = array<i64: 2, 8, 512>}, {transform_indices = @transform_1, window_bounds = array<i64: 8, 512>}, {transform_indices = @transform_2, window_bounds = array<i64: 2, 8, 512>}]} {
    %c0 = arith.constant 0 : index
    %c0_0 = arith.constant 0 : index
    %c0_1 = arith.constant 0 : index
    %0 = vector.load %arg2[%c0, %c0_0, %c0_1] : memref<2x8x512xf32, #tpu.memory_space<vmem>>, vector<2x8x512xf32>
    %c0_2 = arith.constant 0 : index
    %c0_3 = arith.constant 0 : index
    %1 = vector.load %arg3[%c0_2, %c0_3] : memref<8x512xf32, #tpu.memory_space<vmem>>, vector<8x512xf32>
    %2 = vector.shape_cast %1 : vector<8x512xf32> to vector<1x8x512xf32>
    %3 = vector.broadcast %2 : vector<1x8x512xf32> to vector<2x8x512xf32>
    %4 = arith.addf %0, %3 : vector<2x8x512xf32>
    %c0_4 = arith.constant 0 : index
    %c0_5 = arith.constant 0 : index
    %c0_6 = arith.constant 0 : index
    %5 = vector.load %arg4[%c0_4, %c0_5, %c0_6] : memref<2x8x512xf32, #tpu.memory_space<vmem>>, vector<2x8x512xf32>
    tpu.vector_store %arg4[%c0_4, %c0_5, %c0_6], %4 {strides = array<i32>} : memref<2x8x512xf32, #tpu.memory_space<vmem>>, vector<2x8x512xf32>,
    return
  }
  func.func @transform_0(%arg0: i32, %arg1: i32) -> (i32, i32, i32) {
    %c0_i32 = arith.constant 0 : i32
    %c0_i32_0 = arith.constant 0 : i32
    return %arg1, %arg0, %c0_i32 : i32, i32, i32
  }
  func.func @transform_1(%arg0: i32, %arg1: i32) -> (i32, i32) {
    %c0_i32 = arith.constant 0 : i32
    %c0_i32_0 = arith.constant 0 : i32
    return %arg0, %c0_i32 : i32, i32
  }
  func.func @transform_2(%arg0: i32, %arg1: i32) -> (i32, i32, i32) {
    %c0_i32 = arith.constant 0 : i32
    %c0_i32_0 = arith.constant 0 : i32
    return %arg1, %arg0, %c0_i32 : i32, i32, i32
  }
}

</mosaic_0001>

<llo_original>
// kernel: tpu_custom_call.1
$region0: #{tpu_custom_call.1}
  #allocation0 [shape = 'u32[]', space=smem, size = 0x4, offset = 0x4, fixed_abs, tag = 'smem constant byte address 0x4 - core index']
  #allocation1 [shape = 'u32[144,128]{1,0:T(1,128)}', space=vmem, size = 0x12000, scoped, tag = 'internal scratch']
  %s0 = inlined_call_operand.hbm [shape: f32[2,8,512], index: 0, kind: input, shape index: {}]
  %s1 = inlined_call_operand.hbm [shape: f32[8,512], index: 1, kind: input, shape index: {}]
  %s2 = inlined_call_operand.hbm [shape: f32[2,8,512], index: 2, kind: output, shape index: {}]
  %s3 = sld [smem:[#allocation0]]
  $region26: #{tpu_custom_call.1} parent=0
    _
  %s5 = ssub.s32 1, %s3
  %s6 = scalar_select 0, %s5, %s3
  $region1: #{tpu_custom_call.1} parent=0
    #allocation2 [shape = 'u8[32768]{0}', space=vmem, size = 0x8000, scoped, tag = 'input window, operand 0, single buffered']
    #allocation3 [shape = 's32[1]{0}', space=sflag, size = 0x4, scoped, tag = 'scoped memory for tpu_custom_call.1']
    #allocation4 [shape = 's32[1]{0}', space=sflag, size = 0x4, scoped, tag = 'scoped memory for tpu_custom_call.1']
    #allocation5 [shape = 'u8[16384]{0}', space=vmem, size = 0x4000, scoped, tag = 'input window, operand 1, single buffered']
    #allocation6 [shape = 's32[1]{0}', space=sflag, size = 0x4, scoped, tag = 'scoped memory for tpu_custom_call.1']
    #allocation7 [shape = 'u8[32768]{0}', space=vmem, size = 0x8000, scoped, tag = 'output window, operand 0, single buffered']
    %7 = vsyncpa [#allocation3], 0
    %8 = vsyncpa [#allocation6], 0
    %9 = vsyncpa [#allocation4], 0
    // Predicated region
    $region2: #{tpu_custom_call.1} parent=1 // pred_check
      _
    $region3: #{tpu_custom_call.1} parent=1 // pred_check_branch
      %11 = sbr.rel (0) target = $region5
    $region4: #{tpu_custom_call.1} parent=1 // pred_region
      %s13 = ssub.s32 1024, 1024
      %14 = vsyncadd [#allocation3], %s13
      %s15 = sshll.u32 [#allocation2], 4
      %s16 = int_to_ptr.vmem [resolvable:$true] %s15
      %21 = dma.hbm_to_vmem [thread:$0]  %s0, 1024, %s16, [#allocation3], 512, 512, 32
    $region5: #{tpu_custom_call.1} parent=1 // pred_fallthru
      _
    // Predicated region
    $region6: #{tpu_custom_call.1} parent=1 // pred_check
      _
    $region7: #{tpu_custom_call.1} parent=1 // pred_check_branch
      %23 = sbr.rel (0) target = $region9
    $region8: #{tpu_custom_call.1} parent=1 // pred_region
      %s25 = ssub.s32 512, 512
      %26 = vsyncadd [#allocation6], %s25
      %s28 = sshll.u32 [#allocation5], 4
      %s29 = int_to_ptr.vmem [resolvable:$true] %s28
      %31 = dma.hbm_to_vmem [thread:$0]  %s1, 512, %s29, [#allocation6]
    $region9: #{tpu_custom_call.1} parent=1 // pred_fallthru
      _
    // Predicated region
    $region10: #{tpu_custom_call.1} parent=1 // pred_check
      _
    $region11: #{tpu_custom_call.1} parent=1 // pred_check_branch
      %33 = sbr.rel (0) target = $region13
    $region12: #{tpu_custom_call.1} parent=1 // pred_region
      %34 = dma.done [#allocation3], 1024
    $region13: #{tpu_custom_call.1} parent=1 // pred_fallthru
      _
    // Predicated region
    $region14: #{tpu_custom_call.1} parent=1 // pred_check
      _
    $region15: #{tpu_custom_call.1} parent=1 // pred_check_branch
      %36 = sbr.rel (0) target = $region17
    $region16: #{tpu_custom_call.1} parent=1 // pred_region
      %37 = dma.done [#allocation6], 512
    $region17: #{tpu_custom_call.1} parent=1 // pred_fallthru
      _
    %v38 = vld [vmem:[#allocation2] sm:$0xff]
    %v39 = vld [vmem:[#allocation2 + $0x8] sm:$0xff]
    %v40 = vld [vmem:[#allocation2 + $0x10] sm:$0xff]
    %v41 = vld [vmem:[#allocation2 + $0x18] sm:$0xff]
    %v42 = vld [vmem:[#allocation2 + $0x20] sm:$0xff]
    %v43 = vld [vmem:[#allocation2 + $0x28] sm:$0xff]
    %v44 = vld [vmem:[#allocation2 + $0x30] sm:$0xff]
    %v45 = vld [vmem:[#allocation2 + $0x38] sm:$0xff]
    %v46 = vld [vmem:[#allocation5] sm:$0xff]
    %v47 = vld [vmem:[#allocation5 + $0x8] sm:$0xff]
    %v48 = vld [vmem:[#allocation5 + $0x10] sm:$0xff]
    %v49 = vld [vmem:[#allocation5 + $0x18] sm:$0xff]
    %v50 = vadd.f32 %v38, %v46
    %v51 = vadd.f32 %v39, %v47
    %v52 = vadd.f32 %v40, %v48
    %v53 = vadd.f32 %v41, %v49
    %v54 = vadd.f32 %v42, %v46
    %v55 = vadd.f32 %v43, %v47
    %v56 = vadd.f32 %v44, %v48
    %v57 = vadd.f32 %v45, %v49
    %58 = vst [vmem:[#allocation7] sm:$0xff] %v50
    %59 = vst [vmem:[#allocation7 + $0x8] sm:$0xff] %v51
    %60 = vst [vmem:[#allocation7 + $0x10] sm:$0xff] %v52
    %61 = vst [vmem:[#allocation7 + $0x18] sm:$0xff] %v53
    %62 = vst [vmem:[#allocation7 + $0x20] sm:$0xff] %v54
    %63 = vst [vmem:[#allocation7 + $0x28] sm:$0xff] %v55
    %64 = vst [vmem:[#allocation7 + $0x30] sm:$0xff] %v56
    %65 = vst [vmem:[#allocation7 + $0x38] sm:$0xff] %v57
    // Predicated region
    $region18: #{tpu_custom_call.1} parent=1 // pred_check
      _
    $region19: #{tpu_custom_call.1} parent=1 // pred_check_branch
      %67 = sbr.rel (0) target = $region21
    $region20: #{tpu_custom_call.1} parent=1 // pred_region
      %s69 = ssub.s32 1024, 1024
      %70 = vsyncadd [#allocation4], %s69
      %s71 = sshll.u32 [#allocation7], 4
      %s72 = int_to_ptr.vmem [resolvable:$true] %s71
      %77 = dma.vmem_to_hbm [thread:$0]  %s72, 1024, %s2, [#allocation4], 512, 512, 32
    $region21: #{tpu_custom_call.1} parent=1 // pred_fallthru
      _
    // Predicated region
    $region22: #{tpu_custom_call.1} parent=1 // pred_check
      _
    $region23: #{tpu_custom_call.1} parent=1 // pred_check_branch
      %79 = sbr.rel (0) target = $region25
    $region24: #{tpu_custom_call.1} parent=1 // pred_region
      %80 = dma.done [#allocation4], 1024
    $region25: #{tpu_custom_call.1} parent=1 // pred_fallthru
      _
    %81 = vsyncpa [#allocation3], 1
    %82 = vsyncpa [#allocation6], 1
    %83 = vsyncpa [#allocation4], 1

</llo_original>
